<compile_context>
chip_gen: v7x
topology: tpu7x:2x2x1
jax: 0.10.0
libtpu: 0.0.40
codegen_flags: <defaults>
</compile_context>

<pallas_src>
import functools
import math

import jax
import jax.numpy as jnp
from jax import lax
from jax.experimental import pallas as pl
from jax.experimental.pallas import tpu as pltpu


# torch-module defaults
N_FEATURE = 16
IN_CHANNEL = 19
P_DIM = 6                                   # hard-coded in the torch module
FEAT_DIM = IN_CHANNEL - P_DIM               # 13 (see NOTE above)
HIDDEN1 = N_FEATURE                         # 16
HIDDEN2 = N_FEATURE * 2                     # 32
OUT_CHANNEL = (N_FEATURE + P_DIM + 1) * 2   # 46


def _round_up(x, m):
    return (x + m - 1) // m * m


def _decoder_kernel(x_ref, w1_ref, b1_ref, w2_ref, b2_ref, w3_ref, b3_ref,
                    out_ref, *, n_feature, out_channel):
    # Feature-major 3-layer MLP: h = W^T @ x + b (batch on the 128-lane axis).
    x = x_ref[...]                                                             # [in_c, tn]
    h1 = jnp.maximum(
        jnp.dot(w1_ref[...], x, preferred_element_type=jnp.float32)
        + b1_ref[...], 0.0)                                                    # [16, tn]
    h2 = jnp.maximum(
        jnp.dot(w2_ref[...], h1, preferred_element_type=jnp.float32)
        + b2_ref[...], 0.0)                                                    # [32, tn]
    out = (jnp.dot(w3_ref[...], h2, preferred_element_type=jnp.float32)
           + b3_ref[...])                                                      # [46, tn]

    # Per-output-channel activations (same slicing as the torch forward),
    # masks built at (out_channel, 1) and broadcast over the lane axis.
    nf = n_feature
    row = lax.broadcasted_iota(jnp.int32, (out_channel, 1), 0)

    def seg(lo, hi):
        return jnp.logical_and(row >= lo, row < hi)

    # tanh: left_P_xy, left_P_a, right_P_xy, right_P_a
    tanh_mask = (seg(nf, nf + 2) | seg(nf + 5, nf + 6)
                 | seg(2 * nf + 7, 2 * nf + 9) | seg(2 * nf + 12, 2 * nf + 13))
    # sigmoid: left_P_s_wh, left_isleaf, right_P_s_wh, right_isleaf
    sig_mask = (seg(nf + 2, nf + 5) | seg(nf + 6, nf + 7)
                | seg(2 * nf + 9, 2 * nf + 12) | seg(2 * nf + 13, out_channel))

    # single EUP pass: sigmoid(x) = 0.5 * (1 + tanh(x / 2))
    # (mathematically exact; not bit-identical to jax.nn.sigmoid at saturation)
    pre = out * jnp.where(sig_mask, 0.5, 1.0)
    t = jnp.tanh(pre)
    act = jnp.where(tanh_mask, t, jnp.where(sig_mask, 0.5 * (t + 1.0), out))
    out_ref[...] = act.astype(out_ref.dtype)


def decoder_apply_fm(x_t, params, *, tile_cols=512, out_dtype=jnp.float32,
                     buffers=None):
    """Feature-major fast path.

    x_t: [in_channel, n] f32 = cat((Feature_father, P_father), 1) transposed.
    Returns the raw activated MLP output, shape [out_channel, n], `out_dtype`.

    tile_cols guidance: 512 is on the HBM streaming roofline on v5e/v6e/v7x;
    per 512-col block the double-buffered VMEM cost is only ~0.5 MiB, well
    under every chip's default scoped VMEM limit.
    """
    w1_t, b1, w2_t, b2, w3_t, b3 = params
    in_c, n = x_t.shape
    h1, h2 = w1_t.shape[0], w2_t.shape[0]
    out_c = w3_t.shape[0]
    nf = w2_t.shape[1]                       # hidden1 == n_feature in this module
    assert out_c == 2 * (nf + P_DIM + 1), "module hard-codes the P width to 6"

    # Column tile: multiple of 128 lanes; force >= 8 blocks for large n so
    # v7x's 2 TensorCores both get work and the pipeline stays fed.
    tile_cols = max(128, (tile_cols // 128) * 128)
    tile = max(128, min(tile_cols, _round_up(pl.cdiv(n, 8), 128)))
    grid = (pl.cdiv(n, tile),)

    def stream_spec(rows):
        if buffers is None:
            return pl.BlockSpec((rows, tile), lambda i: (0, i))
        return pl.BlockSpec((rows, tile), lambda i: (0, i),
                            pipeline_mode=pl.Buffered(buffers))

    def const_spec(shape):
        # weights/biases: same block every grid step -> stay VMEM-resident
        return pl.BlockSpec(shape, lambda i: (0, 0))

    kernel = functools.partial(_decoder_kernel, n_feature=nf, out_channel=out_c)

    param_bytes = sum(int(p.size) * 4 for p in params)
    cost = pl.CostEstimate(
        flops=2 * n * (in_c * h1 + h1 * h2 + h2 * out_c),
        transcendentals=n * out_c,
        bytes_accessed=(n * in_c * 4
                        + n * out_c * jnp.dtype(out_dtype).itemsize
                        + param_bytes))

    return pl.pallas_call(
        kernel,
        out_shape=jax.ShapeDtypeStruct((out_c, n), out_dtype),
        grid=grid,
        in_specs=[
            stream_spec(in_c),              # fused father block (streamed)
            const_spec(w1_t.shape), const_spec(b1.shape),
            const_spec(w2_t.shape), const_spec(b2.shape),
            const_spec(w3_t.shape), const_spec(b3.shape),
        ],
        out_specs=stream_spec(out_c),
        compiler_params=pltpu.CompilerParams(
            dimension_semantics=("parallel",)),
        cost_estimate=cost,
    )(x_t, w1_t, b1, w2_t, b2, w3_t, b3)


def decoder_forward_fm(x_t, params, **kw):
    """Feature-major outputs: six arrays of shape [nf, n]/[6, n]/[1, n]/..."""
    out_t = decoder_apply_fm(x_t, params, **kw)
    nf = params[2].shape[1]                  # w2_t is [2*nf, nf]
    return (out_t[:nf],
            out_t[nf:nf + P_DIM],
            out_t[nf + P_DIM:nf + P_DIM + 1],
            out_t[nf + P_DIM + 1:2 * nf + P_DIM + 1],
            out_t[2 * nf + P_DIM + 1:2 * nf + 2 * P_DIM + 1],
            out_t[2 * nf + 2 * P_DIM + 1:])


def decoder_forward(feature_father, p_father, params, **kw):
    """Module-compatible interface: [n, d] / [n, 6] in, six [n, *] out.

    NOTE: pays one extra XLA transpose of the inputs and outputs around the
    feature-major kernel. If the surrounding graph can emit/accept the
    [channel, n] layout, call decoder_forward_fm directly and skip that pass.
    """
    x_t = jnp.concatenate([feature_father, p_father], axis=1).T
    return tuple(o.T for o in decoder_forward_fm(x_t, params, **kw))


def init_decoder_params(key, n_feature=N_FEATURE, in_channel=IN_CHANNEL):
    """Matches torch: xavier_uniform_(gain=relu) weights, default Linear bias.

    Weights are stored transposed ([dout, din]) and biases as [dout, 1] so the
    feature-major kernel uses them directly.
    """
    gain = math.sqrt(2.0)  # calculate_gain('relu')
    out_channel = (n_feature + P_DIM + 1) * 2
    dims = (in_channel, n_feature, n_feature * 2, out_channel)
    keys = jax.random.split(key, 2 * (len(dims) - 1))
    params = []
    for i in range(1, len(dims)):
        din, dout = dims[i - 1], dims[i]
        kw, kb = keys[2 * (i - 1)], keys[2 * (i - 1) + 1]
        bound = gain * math.sqrt(6.0 / (din + dout))
        w_t = jax.random.uniform(kw, (dout, din), jnp.float32, -bound, bound)
        bb = 1.0 / math.sqrt(din)
        b = jax.random.uniform(kb, (dout, 1), jnp.float32, -bb, bb)
        params.extend([w_t, b])
    return tuple(params)  # (w1_t, b1, w2_t, b2, w3_t, b3)


def decoder_reference(feature_father, p_father, params):
    """Pure-JAX reference mirroring the torch forward (row-major)."""
    w1_t, b1, w2_t, b2, w3_t, b3 = params
    nf = w2_t.shape[1]
    x = jnp.concatenate([feature_father, p_father], axis=1)
    h1 = jax.nn.relu(x @ w1_t.T + b1[:, 0])
    h2 = jax.nn.relu(h1 @ w2_t.T + b2[:, 0])
    out = h2 @ w3_t.T + b3[:, 0]
    tanh, sig = jnp.tanh, jax.nn.sigmoid
    left_feature = out[:, :nf]
    left_P = jnp.concatenate([tanh(out[:, nf:nf + 2]),
                              sig(out[:, nf + 2:nf + 5]),
                              tanh(out[:, nf + 5:nf + 6])], axis=1)
    left_isleaf = sig(out[:, nf + 6:nf + 7])
    right_feature = out[:, nf + 7:2 * nf + 7]
    right_P = jnp.concatenate([tanh(out[:, 2 * nf + 7:2 * nf + 9]),
                               sig(out[:, 2 * nf + 9:2 * nf + 12]),
                               tanh(out[:, 2 * nf + 12:2 * nf + 13])], axis=1)
    right_isleaf = sig(out[:, 2 * nf + 13:])
    return left_feature, left_P, left_isleaf, right_feature, right_P, right_isleaf


if __name__ == "__main__":
    key = jax.random.PRNGKey(0)
    k_param, k_f, k_p = jax.random.split(key, 3)

    params = init_decoder_params(k_param)

    # batch not a multiple of the 128-col tile -> exercises the grid + partial tail block
    n = 300
    feature_father = jax.random.normal(k_f, (n, FEAT_DIM), jnp.float32)
    p_father = jax.random.normal(k_p, (n, P_DIM), jnp.float32)

    names = ["left_feature", "left_P", "left_isleaf",
             "right_feature", "right_P", "right_isleaf"]
    shapes = [(n, N_FEATURE), (n, P_DIM), (n, 1),
              (n, N_FEATURE), (n, P_DIM), (n, 1)]

    refs = decoder_reference(feature_father, p_father, params)

    # f32 path, module-compatible interface
    outs = decoder_forward(feature_father, p_father, params, tile_cols=128)
    outs = jax.block_until_ready(outs)
    for o, r, nm, sh in zip(outs, refs, names, shapes):
        assert o.shape == sh, (nm, o.shape, sh)
        assert jnp.allclose(o, r, atol=1e-4, rtol=1e-4), nm

    # bf16-output feature-major fast path (halves the dominant HBM write stream)
    x_t = jnp.concatenate([feature_father, p_father], axis=1).T
    outs_fm = decoder_forward_fm(x_t, params, tile_cols=128,
                                 out_dtype=jnp.bfloat16)
    outs_fm = jax.block_until_ready(outs_fm)
    for o, r, nm in zip(outs_fm, refs, names):
        assert o.shape == (r.shape[1], r.shape[0]), (nm, o.shape)
        assert jnp.allclose(o.astype(jnp.float32).T, r, atol=3e-2, rtol=3e-2), nm

    print("KERNEL_OK")
</pallas_src>

<mosaic_0001>
module attributes {stable_mosaic.version = 11 : i64} {
  func.func @_decoder_kernel(%arg0: i32, %arg1: memref<19x128xf32, #tpu.memory_space<vmem>>, %arg2: memref<16x19xf32, #tpu.memory_space<vmem>>, %arg3: memref<16x1xf32, #tpu.memory_space<vmem>>, %arg4: memref<32x16xf32, #tpu.memory_space<vmem>>, %arg5: memref<32x1xf32, #tpu.memory_space<vmem>>, %arg6: memref<46x32xf32, #tpu.memory_space<vmem>>, %arg7: memref<46x1xf32, #tpu.memory_space<vmem>>, %arg8: memref<46x128xf32, #tpu.memory_space<vmem>>) attributes {dimension_semantics = [#tpu.dimension_semantics<parallel>], iteration_bounds = array<i64: 3>, scalar_prefetch = 0 : i64, scratch_operands = 0 : i64, tpu.core_type = #tpu.core_type<tc>, window_params = [{transform_indices = @transform_0, window_bounds = array<i64: 19, 128>}, {pipeline_mode = #tpu.pipeline_mode<synchronous>, transform_indices = @transform_1, window_bounds = array<i64: 16, 19>}, {pipeline_mode = #tpu.pipeline_mode<synchronous>, transform_indices = @transform_2, window_bounds = array<i64: 16, 1>}, {pipeline_mode = #tpu.pipeline_mode<synchronous>, transform_indices = @transform_3, window_bounds = array<i64: 32, 16>}, {pipeline_mode = #tpu.pipeline_mode<synchronous>, transform_indices = @transform_4, window_bounds = array<i64: 32, 1>}, {pipeline_mode = #tpu.pipeline_mode<synchronous>, transform_indices = @transform_5, window_bounds = array<i64: 46, 32>}, {pipeline_mode = #tpu.pipeline_mode<synchronous>, transform_indices = @transform_6, window_bounds = array<i64: 46, 1>}, {transform_indices = @transform_7, window_bounds = array<i64: 46, 128>}]} {
    %c0 = arith.constant 0 : index
    %c0_0 = arith.constant 0 : index
    %0 = vector.load %arg1[%c0, %c0_0] : memref<19x128xf32, #tpu.memory_space<vmem>>, vector<19x128xf32>
    %c0_1 = arith.constant 0 : index
    %c0_2 = arith.constant 0 : index
    %1 = vector.load %arg2[%c0_1, %c0_2] : memref<16x19xf32, #tpu.memory_space<vmem>>, vector<16x19xf32>
    %cst = arith.constant dense<0.000000e+00> : vector<16x128xf32>
    %2 = tpu.matmul %1, %0, %cst {dimension_numbers = #tpu.dot_dimension_numbers<[1], [0], [0], [1], [0, 0, 1, 1], [], []>} : vector<16x19xf32>, vector<19x128xf32>, vector<16x128xf32> -> vector<16x128xf32>
    %c0_3 = arith.constant 0 : index
    %c0_4 = arith.constant 0 : index
    %3 = vector.load %arg3[%c0_3, %c0_4] : memref<16x1xf32, #tpu.memory_space<vmem>>, vector<16x1xf32>
    %4 = vector.broadcast %3 : vector<16x1xf32> to vector<16x128xf32>
    %5 = arith.addf %2, %4 : vector<16x128xf32>
    %cst_5 = arith.constant 0.000000e+00 : f32
    %6 = vector.broadcast %cst_5 : f32 to vector<16x128xf32>
    %7 = arith.maximumf %5, %6 : vector<16x128xf32>
    %c0_6 = arith.constant 0 : index
    %c0_7 = arith.constant 0 : index
    %8 = vector.load %arg4[%c0_6, %c0_7] : memref<32x16xf32, #tpu.memory_space<vmem>>, vector<32x16xf32>
    %cst_8 = arith.constant dense<0.000000e+00> : vector<32x128xf32>
    %9 = tpu.matmul %8, %7, %cst_8 {dimension_numbers = #tpu.dot_dimension_numbers<[1], [0], [0], [1], [0, 0, 1, 1], [], []>} : vector<32x16xf32>, vector<16x128xf32>, vector<32x128xf32> -> vector<32x128xf32>
    %c0_9 = arith.constant 0 : index
    %c0_10 = arith.constant 0 : index
    %10 = vector.load %arg5[%c0_9, %c0_10] : memref<32x1xf32, #tpu.memory_space<vmem>>, vector<32x1xf32>
    %11 = vector.broadcast %10 : vector<32x1xf32> to vector<32x128xf32>
    %12 = arith.addf %9, %11 : vector<32x128xf32>
    %cst_11 = arith.constant 0.000000e+00 : f32
    %13 = vector.broadcast %cst_11 : f32 to vector<32x128xf32>
    %14 = arith.maximumf %12, %13 : vector<32x128xf32>
    %c0_12 = arith.constant 0 : index
    %c0_13 = arith.constant 0 : index
    %15 = vector.load %arg6[%c0_12, %c0_13] : memref<46x32xf32, #tpu.memory_space<vmem>>, vector<46x32xf32>
    %cst_14 = arith.constant dense<0.000000e+00> : vector<46x128xf32>
    %16 = tpu.matmul %15, %14, %cst_14 {dimension_numbers = #tpu.dot_dimension_numbers<[1], [0], [0], [1], [0, 0, 1, 1], [], []>} : vector<46x32xf32>, vector<32x128xf32>, vector<46x128xf32> -> vector<46x128xf32>
    %c0_15 = arith.constant 0 : index
    %c0_16 = arith.constant 0 : index
    %17 = vector.load %arg7[%c0_15, %c0_16] : memref<46x1xf32, #tpu.memory_space<vmem>>, vector<46x1xf32>
    %18 = vector.broadcast %17 : vector<46x1xf32> to vector<46x128xf32>
    %19 = arith.addf %16, %18 : vector<46x128xf32>
    %20 = tpu.iota {dimensions = array<i32: 0>} : vector<46x1xi32>
    %c16_i32 = arith.constant 16 : i32
    %21 = vector.broadcast %c16_i32 : i32 to vector<46x1xi32>
    %22 = arith.cmpi sge, %20, %21 : vector<46x1xi32>
    %c18_i32 = arith.constant 18 : i32
    %23 = vector.broadcast %c18_i32 : i32 to vector<46x1xi32>
    %24 = arith.cmpi slt, %20, %23 : vector<46x1xi32>
    %25 = arith.andi %22, %24 : vector<46x1xi1>
    %c21_i32 = arith.constant 21 : i32
    %26 = vector.broadcast %c21_i32 : i32 to vector<46x1xi32>
    %27 = arith.cmpi sge, %20, %26 : vector<46x1xi32>
    %c22_i32 = arith.constant 22 : i32
    %28 = vector.broadcast %c22_i32 : i32 to vector<46x1xi32>
    %29 = arith.cmpi slt, %20, %28 : vector<46x1xi32>
    %30 = arith.andi %27, %29 : vector<46x1xi1>
    %31 = arith.ori %25, %30 : vector<46x1xi1>
    %c39_i32 = arith.constant 39 : i32
    %32 = vector.broadcast %c39_i32 : i32 to vector<46x1xi32>
    %33 = arith.cmpi sge, %20, %32 : vector<46x1xi32>
    %c41_i32 = arith.constant 41 : i32
    %34 = vector.broadcast %c41_i32 : i32 to vector<46x1xi32>
    %35 = arith.cmpi slt, %20, %34 : vector<46x1xi32>
    %36 = arith.andi %33, %35 : vector<46x1xi1>
    %37 = arith.ori %31, %36 : vector<46x1xi1>
    %c44_i32 = arith.constant 44 : i32
    %38 = vector.broadcast %c44_i32 : i32 to vector<46x1xi32>
    %39 = arith.cmpi sge, %20, %38 : vector<46x1xi32>
    %c45_i32 = arith.constant 45 : i32
    %40 = vector.broadcast %c45_i32 : i32 to vector<46x1xi32>
    %41 = arith.cmpi slt, %20, %40 : vector<46x1xi32>
    %42 = arith.andi %39, %41 : vector<46x1xi1>
    %43 = arith.ori %37, %42 : vector<46x1xi1>
    %c18_i32_17 = arith.constant 18 : i32
    %44 = vector.broadcast %c18_i32_17 : i32 to vector<46x1xi32>
    %45 = arith.cmpi sge, %20, %44 : vector<46x1xi32>
    %c21_i32_18 = arith.constant 21 : i32
    %46 = vector.broadcast %c21_i32_18 : i32 to vector<46x1xi32>
    %47 = arith.cmpi slt, %20, %46 : vector<46x1xi32>
    %48 = arith.andi %45, %47 : vector<46x1xi1>
    %c22_i32_19 = arith.constant 22 : i32
    %49 = vector.broadcast %c22_i32_19 : i32 to vector<46x1xi32>
    %50 = arith.cmpi sge, %20, %49 : vector<46x1xi32>
    %c23_i32 = arith.constant 23 : i32
    %51 = vector.broadcast %c23_i32 : i32 to vector<46x1xi32>
    %52 = arith.cmpi slt, %20, %51 : vector<46x1xi32>
    %53 = arith.andi %50, %52 : vector<46x1xi1>
    %54 = arith.ori %48, %53 : vector<46x1xi1>
    %c41_i32_20 = arith.constant 41 : i32
    %55 = vector.broadcast %c41_i32_20 : i32 to vector<46x1xi32>
    %56 = arith.cmpi sge, %20, %55 : vector<46x1xi32>
    %c44_i32_21 = arith.constant 44 : i32
    %57 = vector.broadcast %c44_i32_21 : i32 to vector<46x1xi32>
    %58 = arith.cmpi slt, %20, %57 : vector<46x1xi32>
    %59 = arith.andi %56, %58 : vector<46x1xi1>
    %60 = arith.ori %54, %59 : vector<46x1xi1>
    %c45_i32_22 = arith.constant 45 : i32
    %61 = vector.broadcast %c45_i32_22 : i32 to vector<46x1xi32>
    %62 = arith.cmpi sge, %20, %61 : vector<46x1xi32>
    %c46_i32 = arith.constant 46 : i32
    %63 = vector.broadcast %c46_i32 : i32 to vector<46x1xi32>
    %64 = arith.cmpi slt, %20, %63 : vector<46x1xi32>
    %65 = arith.andi %62, %64 : vector<46x1xi1>
    %66 = arith.ori %60, %65 : vector<46x1xi1>
    %cst_23 = arith.constant 5.000000e-01 : f32
    %cst_24 = arith.constant 1.000000e+00 : f32
    %67 = vector.broadcast %cst_23 : f32 to vector<46x1xf32>
    %68 = vector.broadcast %cst_24 : f32 to vector<46x1xf32>
    %69 = arith.select %66, %67, %68 : vector<46x1xi1>, vector<46x1xf32>
    %70 = vector.broadcast %69 : vector<46x1xf32> to vector<46x128xf32>
    %71 = arith.mulf %19, %70 : vector<46x128xf32>
    %72 = math.tanh %71 : vector<46x128xf32>
    %cst_25 = arith.constant 1.000000e+00 : f32
    %73 = vector.broadcast %cst_25 : f32 to vector<46x128xf32>
    %74 = arith.addf %72, %73 : vector<46x128xf32>
    %cst_26 = arith.constant 5.000000e-01 : f32
    %75 = vector.broadcast %cst_26 : f32 to vector<46x128xf32>
    %76 = arith.mulf %75, %74 : vector<46x128xf32>
    %77 = vector.shape_cast %66 : vector<46x1xi1> to vector<46x1xi1>
    %78 = vector.broadcast %77 : vector<46x1xi1> to vector<46x128xi1>
    %79 = arith.select %78, %76, %19 : vector<46x128xi1>, vector<46x128xf32>
    %80 = vector.shape_cast %43 : vector<46x1xi1> to vector<46x1xi1>
    %81 = vector.broadcast %80 : vector<46x1xi1> to vector<46x128xi1>
    %82 = arith.select %81, %72, %79 : vector<46x128xi1>, vector<46x128xf32>
    %c0_27 = arith.constant 0 : index
    %c0_28 = arith.constant 0 : index
    %83 = vector.load %arg8[%c0_27, %c0_28] : memref<46x128xf32, #tpu.memory_space<vmem>>, vector<46x128xf32>
    tpu.vector_store %arg8[%c0_27, %c0_28], %82 {strides = array<i32>} : memref<46x128xf32, #tpu.memory_space<vmem>>, vector<46x128xf32>,
    return
  }
  func.func @transform_0(%arg0: i32) -> (i32, i32) {
    %c0_i32 = arith.constant 0 : i32
    %c0_i32_0 = arith.constant 0 : i32
    return %c0_i32, %arg0 : i32, i32
  }
  func.func @transform_1(%arg0: i32) -> (i32, i32) {
    %c0_i32 = arith.constant 0 : i32
    %c0_i32_0 = arith.constant 0 : i32
    %c0_i32_1 = arith.constant 0 : i32
    return %c0_i32, %c0_i32_0 : i32, i32
  }
  func.func @transform_2(%arg0: i32) -> (i32, i32) {
    %c0_i32 = arith.constant 0 : i32
    %c0_i32_0 = arith.constant 0 : i32
    %c0_i32_1 = arith.constant 0 : i32
    return %c0_i32, %c0_i32_0 : i32, i32
  }
  func.func @transform_3(%arg0: i32) -> (i32, i32) {
    %c0_i32 = arith.constant 0 : i32
    %c0_i32_0 = arith.constant 0 : i32
    %c0_i32_1 = arith.constant 0 : i32
    return %c0_i32, %c0_i32_0 : i32, i32
  }
  func.func @transform_4(%arg0: i32) -> (i32, i32) {
    %c0_i32 = arith.constant 0 : i32
    %c0_i32_0 = arith.constant 0 : i32
    %c0_i32_1 = arith.constant 0 : i32
    return %c0_i32, %c0_i32_0 : i32, i32
  }
  func.func @transform_5(%arg0: i32) -> (i32, i32) {
    %c0_i32 = arith.constant 0 : i32
    %c0_i32_0 = arith.constant 0 : i32
    %c0_i32_1 = arith.constant 0 : i32
    return %c0_i32, %c0_i32_0 : i32, i32
  }
  func.func @transform_6(%arg0: i32) -> (i32, i32) {
    %c0_i32 = arith.constant 0 : i32
    %c0_i32_0 = arith.constant 0 : i32
    %c0_i32_1 = arith.constant 0 : i32
    return %c0_i32, %c0_i32_0 : i32, i32
  }
  func.func @transform_7(%arg0: i32) -> (i32, i32) {
    %c0_i32 = arith.constant 0 : i32
    %c0_i32_0 = arith.constant 0 : i32
    return %c0_i32, %arg0 : i32, i32
  }
}

</mosaic_0001>

<llo_original>
// kernel: tpu_custom_call.1
$region0: #{tpu_custom_call.1}
  #allocation0 [shape = 'u32[]', space=smem, size = 0x4, offset = 0x4, fixed_abs, tag = 'smem constant byte address 0x4 - core index']
  #allocation1 [shape = 'u32[144,128]{1,0:T(1,128)}', space=vmem, size = 0x12000, scoped, tag = 'internal scratch']
  %s0 = inlined_call_operand.vmem [shape: f32[19,300], index: 0, kind: input, shape index: {}]
  %s1 = inlined_call_operand.vmem [shape: f32[16,19], index: 1, kind: input, shape index: {}]
  %s2 = inlined_call_operand.vmem [shape: f32[16,1], index: 2, kind: input, shape index: {}]
  %s3 = inlined_call_operand.vmem [shape: f32[32,16], index: 3, kind: input, shape index: {}]
  %s4 = inlined_call_operand.vmem [shape: f32[32,1], index: 4, kind: input, shape index: {}]
  %s5 = inlined_call_operand.vmem [shape: f32[46,32], index: 5, kind: input, shape index: {}]
  %s6 = inlined_call_operand.vmem [shape: f32[46,1], index: 6, kind: input, shape index: {}]
  %s7 = inlined_call_operand.hbm [shape: f32[46,300], index: 7, kind: output, shape index: {}]
  %s8 = sld [smem:[#allocation0]]
  $region99: #{tpu_custom_call.1} parent=0
    _
  %s10 = ssub.s32 1, %s8
  %s11 = scalar_select 0, %s10, %s8
  $region1: #{tpu_custom_call.1} parent=0
    #allocation2 [shape = 'u8[24576]{0}', space=vmem, size = 0x6000, scoped, tag = 'input window, operand 0']
    #allocation3 [shape = 'u8[49152]{0}', space=vmem, size = 0xc000, scoped, tag = 'output window, operand 0']
    #allocation4 [shape = 's32[2]{0}', space=sflag, size = 0x8, scoped, tag = 'scoped memory for tpu_custom_call.1']
    %12 = vsyncpa [#allocation4], 0
    %s13 = scalar_lea.sflag [#allocation4], 1
    %14 = vsyncpa %s13, 0
    loop: start=0, step=1, limit=5
    $region2: #{tpu_custom_call.1} parent=1 // loop_pre_header
      _
    $region3: #{tpu_custom_call.1} parent=1 // loop_header
      %s16 = sphi 0, %s20
      %p17 = scmp.ge.s32.totalorder %s16, 5
      %s26 = sphi 0, %s28
      %s29 = sphi 0, %s26
      %s30 = sphi 0, %s29
      %s46 = sphi 0, %s30
      %s50 = sphi 0, %s50
      %s52 = sphi 0, %s50
      %s53 = sphi 0, %s52
      %s67 = sphi 0, %s53
      %s71 = sphi 0, %s71
      %s73 = sphi 0, %s71
      %s74 = sphi 0, %s73
      %s88 = sphi 0, %s74
      %s92 = sphi 0, %s92
      %s94 = sphi 0, %s92
      %s95 = sphi 0, %s94
      %s109 = sphi 0, %s95
      %s113 = sphi 0, %s113
      %s115 = sphi 0, %s113
      %s116 = sphi 0, %s115
      %s130 = sphi 0, %s116
      %s134 = sphi 0, %s134
      %s136 = sphi 0, %s134
      %s137 = sphi 0, %s136
      %s151 = sphi 0, %s137
      %s155 = sphi 0, %s155
      %s157 = sphi 0, %s155
      %s158 = sphi 0, %s157
      %s172 = sphi 0, %s158
      %s178 = sphi 0, %s180
      %s181 = sphi 0, %s178
      %s182 = sphi 0, %s181
      %s198 = sphi 0, %s182
    $region4: #{tpu_custom_call.1} parent=1 // loop_header_branch
      %19 = sbr.rel (%p17) target = $region8
    $region5: #{tpu_custom_call.1} parent=1 // loop_body
      %s21 = ssub.s32 %s16, 1
      %s22 = ssub.s32 %s16, 2
      %s23 = sadd.s32 %s16, 1
      %s24 = ssub.s32 %s16, %s23
      %p25 = scmp.eq.s32.totalorder %s24, 0
      %s27 = sadd.s32 %s26, 1
      %s28 = scalar_select %p25, %s26, %s27
      %p31 = pneg %p25
      %p32 = scmp.eq.s32.totalorder %s16, 2
      %p33 = por %p31, %p32
      %p34 = scmp.ne.s32.totalorder %s26, %s29
      %p35 = scmp.eq.s32.totalorder %s16, 0
      %p36 = por %p34, %p35
      %p37 = scmp.ne.s32.totalorder %s26, %s29
      %p38 = scmp.eq.s32.totalorder %s21, 2
      %p39 = por %p37, %p38
      %p40 = scmp.ne.s32.totalorder %s29, %s30
      %p41 = scmp.eq.s32.totalorder %s21, 0
      %p42 = por %p40, %p41
      %p43 = scmp.ne.s32.totalorder %s29, %s30
      %p44 = scmp.eq.s32.totalorder %s22, 2
      %p45 = por %p43, %p44
      %p47 = scmp.ne.s32.totalorder %s30, %s46
      %p48 = scmp.eq.s32.totalorder %s22, 0
      %p49 = por %p47, %p48
      %s51 = sadd.s32 %s50, 1
      %p54 = scmp.eq.s32.totalorder %s16, 2
      %p55 = scmp.ne.s32.totalorder %s50, %s52
      %p56 = scmp.eq.s32.totalorder %s16, 0
      %p57 = por %p55, %p56
      %p58 = scmp.ne.s32.totalorder %s50, %s52
      %p59 = scmp.eq.s32.totalorder %s21, 2
      %p60 = por %p58, %p59
      %p61 = scmp.ne.s32.totalorder %s52, %s53
      %p62 = scmp.eq.s32.totalorder %s21, 0
      %p63 = por %p61, %p62
      %p64 = scmp.ne.s32.totalorder %s52, %s53
      %p65 = scmp.eq.s32.totalorder %s22, 2
      %p66 = por %p64, %p65
      %p68 = scmp.ne.s32.totalorder %s53, %s67
      %p69 = scmp.eq.s32.totalorder %s22, 0
      %p70 = por %p68, %p69
      %s72 = sadd.s32 %s71, 1
      %p75 = scmp.eq.s32.totalorder %s16, 2
      %p76 = scmp.ne.s32.totalorder %s71, %s73
      %p77 = scmp.eq.s32.totalorder %s16, 0
      %p78 = por %p76, %p77
      %p79 = scmp.ne.s32.totalorder %s71, %s73
      %p80 = scmp.eq.s32.totalorder %s21, 2
      %p81 = por %p79, %p80
      %p82 = scmp.ne.s32.totalorder %s73, %s74
      %p83 = scmp.eq.s32.totalorder %s21, 0
      %p84 = por %p82, %p83
      %p85 = scmp.ne.s32.totalorder %s73, %s74
      %p86 = scmp.eq.s32.totalorder %s22, 2
      %p87 = por %p85, %p86
      %p89 = scmp.ne.s32.totalorder %s74, %s88
      %p90 = scmp.eq.s32.totalorder %s22, 0
      %p91 = por %p89, %p90
      %s93 = sadd.s32 %s92, 1
      %p96 = scmp.eq.s32.totalorder %s16, 2
      %p97 = scmp.ne.s32.totalorder %s92, %s94
      %p98 = scmp.eq.s32.totalorder %s16, 0
      %p99 = por %p97, %p98
      %p100 = scmp.ne.s32.totalorder %s92, %s94
      %p101 = scmp.eq.s32.totalorder %s21, 2
      %p102 = por %p100, %p101
      %p103 = scmp.ne.s32.totalorder %s94, %s95
      %p104 = scmp.eq.s32.totalorder %s21, 0
      %p105 = por %p103, %p104
      %p106 = scmp.ne.s32.totalorder %s94, %s95
      %p107 = scmp.eq.s32.totalorder %s22, 2
      %p108 = por %p106, %p107
      %p110 = scmp.ne.s32.totalorder %s95, %s109
      %p111 = scmp.eq.s32.totalorder %s22, 0
      %p112 = por %p110, %p111
      %s114 = sadd.s32 %s113, 1
      %p117 = scmp.eq.s32.totalorder %s16, 2
      %p118 = scmp.ne.s32.totalorder %s113, %s115
      %p119 = scmp.eq.s32.totalorder %s16, 0
      %p120 = por %p118, %p119
      %p121 = scmp.ne.s32.totalorder %s113, %s115
      %p122 = scmp.eq.s32.totalorder %s21, 2
      %p123 = por %p121, %p122
      %p124 = scmp.ne.s32.totalorder %s115, %s116
      %p125 = scmp.eq.s32.totalorder %s21, 0
      %p126 = por %p124, %p125
      %p127 = scmp.ne.s32.totalorder %s115, %s116
      %p128 = scmp.eq.s32.totalorder %s22, 2
      %p129 = por %p127, %p128
      %p131 = scmp.ne.s32.totalorder %s116, %s130
      %p132 = scmp.eq.s32.totalorder %s22, 0
      %p133 = por %p131, %p132
      %s135 = sadd.s32 %s134, 1
      %p138 = scmp.eq.s32.totalorder %s16, 2
      %p139 = scmp.ne.s32.totalorder %s134, %s136
      %p140 = scmp.eq.s32.totalorder %s16, 0
      %p141 = por %p139, %p140
      %p142 = scmp.ne.s32.totalorder %s134, %s136
      %p143 = scmp.eq.s32.totalorder %s21, 2
      %p144 = por %p142, %p143
      %p145 = scmp.ne.s32.totalorder %s136, %s137
      %p146 = scmp.eq.s32.totalorder %s21, 0
      %p147 = por %p145, %p146
      %p148 = scmp.ne.s32.totalorder %s136, %s137
      %p149 = scmp.eq.s32.totalorder %s22, 2
      %p150 = por %p148, %p149
      %p152 = scmp.ne.s32.totalorder %s137, %s151
      %p153 = scmp.eq.s32.totalorder %s22, 0
      %p154 = por %p152, %p153
      %s156 = sadd.s32 %s155, 1
      %p159 = scmp.eq.s32.totalorder %s16, 2
      %p160 = scmp.ne.s32.totalorder %s155, %s157
      %p161 = scmp.eq.s32.totalorder %s16, 0
      %p162 = por %p160, %p161
      %p163 = scmp.ne.s32.totalorder %s155, %s157
      %p164 = scmp.eq.s32.totalorder %s21, 2
      %p165 = por %p163, %p164
      %p166 = scmp.ne.s32.totalorder %s157, %s158
      %p167 = scmp.eq.s32.totalorder %s21, 0
      %p168 = por %p166, %p167
      %p169 = scmp.ne.s32.totalorder %s157, %s158
      %p170 = scmp.eq.s32.totalorder %s22, 2
      %p171 = por %p169, %p170
      %p173 = scmp.ne.s32.totalorder %s158, %s172
      %p174 = scmp.eq.s32.totalorder %s22, 0
      %p175 = por %p173, %p174
      %s176 = ssub.s32 %s16, %s23
      %p177 = scmp.eq.s32.totalorder %s176, 0
      %s179 = sadd.s32 %s178, 1
      %s180 = scalar_select %p177, %s178, %s179
      %p183 = pneg %p177
      %p184 = scmp.eq.s32.totalorder %s16, 2
      %p185 = por %p183, %p184
      %p186 = scmp.ne.s32.totalorder %s178, %s181
      %p187 = scmp.eq.s32.totalorder %s16, 0
      %p188 = por %p186, %p187
      %p189 = scmp.ne.s32.totalorder %s178, %s181
      %p190 = scmp.eq.s32.totalorder %s21, 2
      %p191 = por %p189, %p190
      %p192 = scmp.ne.s32.totalorder %s181, %s182
      %p193 = scmp.eq.s32.totalorder %s21, 0
      %p194 = por %p192, %p193
      %p195 = scmp.ne.s32.totalorder %s181, %s182
      %p196 = scmp.eq.s32.totalorder %s22, 2
      %p197 = por %p195, %p196
      %p199 = scmp.ne.s32.totalorder %s182, %s198
      %p200 = scmp.eq.s32.totalorder %s22, 0
      %p201 = por %p199, %p200
      %p202 = scmp.le.s32.totalorder 1, %s16
      %p203 = scmp.lt.s32.totalorder %s16, 4
      %p204 = pnand %p202, %p203
      %p205 = pneg %p204
      // Predicated region
      $region9: #{tpu_custom_call.1} parent=5 // pred_check
        _
      $region10: #{tpu_custom_call.1} parent=5 // pred_check_branch
        %207 = sbr.rel (%p204) target = $region12
      $region11: #{tpu_custom_call.1} parent=5 // pred_region
        %s208 = ssub.s32 %s16, 1
        // Predicated region
        $region13: #{tpu_custom_call.1} parent=11 // pred_check
          %p209 = pneg %p63
        $region14: #{tpu_custom_call.1} parent=11 // pred_check_branch
          %211 = sbr.rel (%p209) target = $region16
        $region15: #{tpu_custom_call.1} parent=11 // pred_region
          _
        $region16: #{tpu_custom_call.1} parent=11 // pred_fallthru
          _
        // Predicated region
        $region17: #{tpu_custom_call.1} parent=11 // pred_check
          %p212 = pneg %p84
        $region18: #{tpu_custom_call.1} parent=11 // pred_check_branch
          %214 = sbr.rel (%p212) target = $region20
        $region19: #{tpu_custom_call.1} parent=11 // pred_region
          _
        $region20: #{tpu_custom_call.1} parent=11 // pred_fallthru
          _
        // Predicated region
        $region21: #{tpu_custom_call.1} parent=11 // pred_check
          %p215 = pneg %p105
        $region22: #{tpu_custom_call.1} parent=11 // pred_check_branch
          %217 = sbr.rel (%p215) target = $region24
        $region23: #{tpu_custom_call.1} parent=11 // pred_region
          _
        $region24: #{tpu_custom_call.1} parent=11 // pred_fallthru
          _
        // Predicated region
        $region25: #{tpu_custom_call.1} parent=11 // pred_check
          %p218 = pneg %p126
        $region26: #{tpu_custom_call.1} parent=11 // pred_check_branch
          %220 = sbr.rel (%p218) target = $region28
        $region27: #{tpu_custom_call.1} parent=11 // pred_region
          _
        $region28: #{tpu_custom_call.1} parent=11 // pred_fallthru
          _
        // Predicated region
        $region29: #{tpu_custom_call.1} parent=11 // pred_check
          %p221 = pneg %p147
        $region30: #{tpu_custom_call.1} parent=11 // pred_check_branch
          %223 = sbr.rel (%p221) target = $region32
        $region31: #{tpu_custom_call.1} parent=11 // pred_region
          _
        $region32: #{tpu_custom_call.1} parent=11 // pred_fallthru
          _
        // Predicated region
        $region33: #{tpu_custom_call.1} parent=11 // pred_check
          %p224 = pneg %p168
        $region34: #{tpu_custom_call.1} parent=11 // pred_check_branch
          %226 = sbr.rel (%p224) target = $region36
        $region35: #{tpu_custom_call.1} parent=11 // pred_region
          _
        $region36: #{tpu_custom_call.1} parent=11 // pred_fallthru
          _
      $region12: #{tpu_custom_call.1} parent=5 // pred_fallthru
        _
      %p227 = scmp.lt.s32.totalorder %s16, 3
      // Predicated region
      $region37: #{tpu_custom_call.1} parent=5 // pred_check
        %p228 = pneg %p227
      $region38: #{tpu_custom_call.1} parent=5 // pred_check_branch
        %230 = sbr.rel (%p228) target = $region40
      $region39: #{tpu_custom_call.1} parent=5 // pred_region
        // Predicated region
        $region41: #{tpu_custom_call.1} parent=39 // pred_check
          %p231 = pneg %p36
        $region42: #{tpu_custom_call.1} parent=39 // pred_check_branch
          %233 = sbr.rel (%p231) target = $region44
        $region43: #{tpu_custom_call.1} parent=39 // pred_region
          %s234 = sand.u32 %s26, 1
          %s235 = sand.u32 %s26, 1
          %s236 = smul.addr %s235, 24
          %s237 = scalar_lea.vmem [#allocation2], %s236
          %s238 = smul.addr %s16, 8
          %s239 = scalar_lea.vmem %s0, %s238
          // Predicated region
          $region45: #{tpu_custom_call.1} parent=43 // pred_check
            _
          $region46: #{tpu_custom_call.1} parent=43 // pred_check_branch
            %241 = sbr.rel (0) target = $region48
          $region47: #{tpu_custom_call.1} parent=43 // pred_region
            // Predicated region
            $region49: #{tpu_custom_call.1} parent=47 // pred_check
              _
            $region50: #{tpu_custom_call.1} parent=47 // pred_check_branch
              %243 = sbr.rel (0) target = $region52
            $region51: #{tpu_custom_call.1} parent=47 // pred_region
              // Predicated region
              $region64: #{tpu_custom_call.1} parent=51 // pred_check
                _
              $region65: #{tpu_custom_call.1} parent=51 // pred_check_branch
                %262 = sbr.rel (0) target = $region67
              $region66: #{tpu_custom_call.1} parent=51 // pred_region
                loop: start=0, step=1, limit=1
                $region68: #{tpu_custom_call.1} parent=66 // loop_pre_header
                  _
                $region69: #{tpu_custom_call.1} parent=66 // loop_header
                  %s264 = sphi 0, %s268
                  %p265 = scmp.ge.s32.totalorder %s264, 1
                  %s269 = sphi %s239, %s239
                  %s270 = sphi %s237, %s237
                $region70: #{tpu_custom_call.1} parent=66 // loop_header_branch
                  %267 = sbr.rel (%p265) target = $region74
                $region71: #{tpu_custom_call.1} parent=66 // loop_body
                  %v271 = vld [vmem:[%s269] sm:$0xff]
                  %272 = vst [vmem:[%s270] sm:$0xff] %v271
                  %v273 = vld [vmem:[%s269 + $0x18] sm:$0xff]
                  %274 = vst [vmem:[%s270 + $0x8] sm:$0xff] %v273
                  %v275 = vld [vmem:[%s269 + $0x30] sm:$0xff]
                  %276 = vst [vmem:[%s270 + $0x10] sm:$0xff] %v275
                $region72: #{tpu_custom_call.1} parent=66 // loop_footer
                  %s268 = sadd.s32 1, %s264
                $region73: #{tpu_custom_call.1} parent=66 // loop_footer_branch
                  %263 = sbr.rel target = $region69
                $region74: #{tpu_custom_call.1} parent=66 // loop_exit
                  _
              $region67: #{tpu_custom_call.1} parent=51 // pred_fallthru
                _
              // Predicated region
              $region75: #{tpu_custom_call.1} parent=51 // pred_check
                _
              $region76: #{tpu_custom_call.1} parent=51 // pred_check_branch
                %278 = sbr.rel target = $region78
              $region77: #{tpu_custom_call.1} parent=51 // pred_region
                _
              $region78: #{tpu_custom_call.1} parent=51 // pred_fallthru
                _
            $region52: #{tpu_custom_call.1} parent=47 // pred_fallthru
              _
            // Predicated region
            $region53: #{tpu_custom_call.1} parent=47 // pred_check
              _
            $region54: #{tpu_custom_call.1} parent=47 // pred_check_branch
              %245 = sbr.rel target = $region56
            $region55: #{tpu_custom_call.1} parent=47 // pred_region
              loop: start=0, step=1, limit=1
              $region57: #{tpu_custom_call.1} parent=55 // loop_pre_header
                _
              $region58: #{tpu_custom_call.1} parent=55 // loop_header
                %s248 = sphi 0, %s252
                %p249 = scmp.ge.s32.totalorder %s248, 1
                %s253 = sphi %s239, %s239
                %s254 = sphi %s237, %s237
              $region59: #{tpu_custom_call.1} parent=55 // loop_header_branch
                %251 = sbr.rel (%p249) target = $region63
              $region60: #{tpu_custom_call.1} parent=55 // loop_body
                %v255 = vld [vmem:[%s253] sm:$0xff]
                %256 = vst [vmem:[%s254] sm:$0xff] %v255
                %v257 = vld [vmem:[%s253 + $0x18] sm:$0xff]
                %258 = vst [vmem:[%s254 + $0x8] sm:$0xff] %v257
                %v259 = vld [vmem:[%s253 + $0x30] sm:$0xff]
                %260 = vst [vmem:[%s254 + $0x10] sm:$0xff] %v259
              $region61: #{tpu_custom_call.1} parent=55 // loop_footer
                %s252 = sadd.s32 1, %s248
              $region62: #{tpu_custom_call.1} parent=55 // loop_footer_branch
                %247 = sbr.rel target = $region58
              $region63: #{tpu_custom_call.1} parent=55 // loop_exit
                _
            $region56: #{tpu_custom_call.1} parent=47 // pred_fallthru
              _
          $region48: #{tpu_custom_call.1} parent=43 // pred_fallthru
            _
          %279 = vnop
        $region44: #{tpu_custom_call.1} parent=39 // pred_fallthru
          _
      $region40: #{tpu_custom_call.1} parent=5 // pred_fallthru
        _
      %p280 = scmp.le.s32.totalorder 1, %s16
      %p281 = scmp.lt.s32.totalorder %s16, 4
      %p282 = pnand %p280, %p281
      %p283 = pneg %p282
      // Predicated region
      $region79: #{tpu_custom_call.1} parent=5 // pred_check
        _
      $region80: #{tpu_custom_call.1} parent=5 // pred_check_branch
        %285 = sbr.rel (%p282) target = $region82
      $region81: #{tpu_custom_call.1} parent=5 // pred_region
        %s286 = ssub.s32 %s16, 1
        %s287 = sand.u32 %s29, 1
        %s288 = sand.u32 %s29, 1
        %s289 = smul.addr %s288, 24
        %s290 = scalar_lea.vmem [#allocation2], %s289
        // Predicated region
        $region83: #{tpu_custom_call.1} parent=81 // pred_check
          %p291 = pneg %p42
        $region84: #{tpu_custom_call.1} parent=81 // pred_check_branch
          %293 = sbr.rel (%p291) target = $region86
        $region85: #{tpu_custom_call.1} parent=81 // pred_region
          _
        $region86: #{tpu_custom_call.1} parent=81 // pred_fallthru
          _
        %s294 = sand.u32 %s29, 1
        %s295 = sand.u32 %s29, 1
        %s296 = smul.addr %s295, 24
        %s297 = scalar_lea.vmem [#allocation2], %s296
        %p298 = pneg %p42
        %p299 = pneg %p39
        %p300 = pneg %p63
        %p301 = pneg %p60
        %p302 = pneg %p84
        %p303 = pneg %p81
        %p304 = pneg %p105
        %p305 = pneg %p102
        %p306 = pneg %p126
        %p307 = pneg %p123
        %p308 = pneg %p147
        %p309 = pneg %p144
        %p310 = pneg %p168
        %p311 = pneg %p165
        %p312 = pneg %p194
        %p313 = pneg %p191
        %s314 = sand.u32 %s181, 1
        %s315 = scalar_lea.sflag [#allocation4], %s314
        %s316 = sand.u32 %s181, 1
        %s317 = smul.addr %s316, 48
        %s318 = scalar_lea.vmem [#allocation3], %s317
        %v319 = vld [vmem:[%s290] sm:$0xff]
        %v320 = vld [vmem:[%s290 + $0x8] sm:$0xff]
        %v321 = vld [vmem:[%s290 + $0x10] sm:$0x7]
        %v322 = vld [vmem:[%s1] sm:$0xff]
        %v323 = vld [vmem:[%s1 + $0x8] sm:$0xff]
        %v324 = vld [vmem:[%s2] sm:$0xff]
        %v325 = vld [vmem:[%s2 + $0x8] sm:$0xff]
        %327 = vset.pattern.permute.xlu0 0
        %328 = vperm.xlu0 %327, %v324
        %v329 = vpop.permute.xlu0 %328
        %332 = vset.pattern.permute.xlu0 0
        %333 = vperm.xlu0 %332, %v325
        %v334 = vpop.permute.xlu0 %333
        %vm336 = vcmask 154624
        %v338 = vsel %vm336, %v322, 0
        %v341 = vsel %vm336, %v323, 0
        %vm343 = vcmask 1042432
        %v345 = vsel %vm343, %v321, 0
        %347 = vmatprep.subr.mxu0 0.0
        %348 = vmatpush1.msra.mxu0 %v319
        %349 = vmatprep.subr.mxu0 0.0
        %350 = vmatpush1.msra.mxu0 %v320
        %351 = vmatprep.subr.mxu0 0.0
        %352 = vmatpush1.msra.mxu0 %v345
        %353 = vmatprep.subr.mxu0 0.0
        %354 = vmatpush1.msra.mxu0 0.0
        %355 = vmatprep.subr.mxu0 0.0
        %356 = vmatpush1.msra.mxu0 0.0
        %357 = vmatprep.subr.mxu0 0.0
        %358 = vmatpush1.msra.mxu0 0.0
        %359 = vmatprep.subr.mxu0 0.0
        %360 = vmatpush1.msra.mxu0 0.0
        %361 = vmatprep.subr.mxu0 0.0
        %362 = vmatpush1.msra.mxu0 0.0
        %363 = vmatprep.subr.mxu0 0.0
        %364 = vmatpush1.msra.mxu0 0.0
        %365 = vmatprep.subr.mxu0 0.0
        %366 = vmatpush1.msra.mxu0 0.0
        %367 = vmatprep.subr.mxu0 0.0
        %368 = vmatpush1.msra.mxu0 0.0
        %369 = vmatprep.subr.mxu0 0.0
        %370 = vmatpush1.msra.mxu0 0.0
        %371 = vmatprep.subr.mxu0 0.0
        %372 = vmatpush1.msra.mxu0 0.0
        %373 = vmatprep.subr.mxu0 0.0
        %374 = vmatpush1.msra.mxu0 0.0
        %375 = vmatprep.subr.mxu0 0.0
        %376 = vmatpush1.msra.mxu0 0.0
        %377 = vmatprep.subr.mxu0 0.0
        %378 = vmatpush1.msra.mxu0 0.0
        %379 = vmatprep.subr.mxu0 0.0
        %380 = vmatpush1.msra.mxu0 0.0
        %381 = vmatprep.subr.mxu0 0.0
        %382 = vmatpush1.msra.mxu0 0.0
        %383 = vmatprep.subr.mxu0 0.0
        %384 = vmatpush1.msra.mxu0 0.0
        %385 = vmatprep.subr.mxu0 0.0
        %386 = vmatpush1.msra.mxu0 0.0
        %387 = vmatprep.subr.mxu0 0.0
        %388 = vmatpush1.msra.mxu0 0.0
        %389 = vmatprep.subr.mxu0 0.0
        %390 = vmatpush1.msra.mxu0 0.0
        %391 = vmatprep.subr.mxu0 0.0
        %392 = vmatpush1.msra.mxu0 0.0
        %393 = vmatprep.subr.mxu0 0.0
        %394 = vmatpush1.msra.mxu0 0.0
        %395 = vmatprep.subr.mxu0 0.0
        %396 = vmatpush1.msra.mxu0 0.0
        %397 = vmatprep.subr.mxu0 0.0
        %398 = vmatpush1.msra.mxu0 0.0
        %399 = vmatprep.subr.mxu0 0.0
        %400 = vmatpush1.msra.mxu0 0.0
        %401 = vmatprep.subr.mxu0 0.0
        %402 = vmatpush1.msra.mxu0 0.0
        %403 = vmatprep.subr.mxu0 0.0
        %404 = vmatpush1.msra.mxu0 0.0
        %405 = vmatprep.subr.mxu0 0.0
        %406 = vmatpush1.msra.mxu0 0.0
        %407 = vmatprep.subr.mxu0 0.0
        %408 = vmatpush1.msra.mxu0 0.0
        %409 = vmatprep.subr.mxu0 0.0
        %410 = vmatpush1.msra.mxu0 0.0
        %411 = vmatprep.mubr.f32.mxu0 0.0
        %412 = vmatmul.mubr.f32.gmra.mrb[0].mxu0 %v338
        %v413 = vpop.f32.mrb[0].mxu0
        %v414 = vadd.f32 %v329, %v413
        %v415 = vpop.f32.mrb[0].mxu0
        %416 = vmatprep.mubr.f32.mxu0 0.0
        %417 = vmatmul.mubr.f32.gmra.mrb[0].mxu0 %v341
        %v418 = vpop.f32.mrb[0].mxu0
        %v419 = vadd.f32 %v334, %v418
        %v420 = vpop.f32.mrb[0].mxu0
        %421 = vdwg.mxu0
        %v422 = vmax.f32 %v414, 0.0
        %v423 = vmax.f32 %v419, 0.0
        %v424 = vld [vmem:[%s3] sm:$0xff]
        %v425 = vld [vmem:[%s3 + $0x8] sm:$0xff]
        %v426 = vld [vmem:[%s3 + $0x10] sm:$0xff]
        %v427 = vld [vmem:[%s3 + $0x18] sm:$0xff]
        %v428 = vld [vmem:[%s4] sm:$0xff]
        %v429 = vld [vmem:[%s4 + $0x8] sm:$0xff]
        %v430 = vld [vmem:[%s4 + $0x10] sm:$0xff]
        %v431 = vld [vmem:[%s4 + $0x18] sm:$0xff]
        %433 = vset.pattern.permute.xlu0 0
        %434 = vperm.xlu0 %433, %v428
        %v435 = vpop.permute.xlu0 %434
        %438 = vset.pattern.permute.xlu0 0
        %439 = vperm.xlu0 %438, %v429
        %v440 = vpop.permute.xlu0 %439
        %443 = vset.pattern.permute.xlu0 0
        %444 = vperm.xlu0 %443, %v430
        %v445 = vpop.permute.xlu0 %444
        %448 = vset.pattern.permute.xlu0 0
        %449 = vperm.xlu0 %448, %v431
        %v450 = vpop.permute.xlu0 %449
        %vm452 = vcmask 130048
        %v454 = vsel %vm452, %v424, 0
        %v457 = vsel %vm452, %v425, 0
        %v460 = vsel %vm452, %v426, 0
        %v463 = vsel %vm452, %v427, 0
        %465 = vmatprep.subr.mxu0 0.0
        %466 = vmatpush1.msra.mxu0 %v422
        %467 = vmatprep.subr.mxu0 0.0
        %468 = vmatpush1.msra.mxu0 %v423
        %469 = vmatprep.subr.mxu0 0.0
        %470 = vmatpush1.msra.mxu0 0.0
        %471 = vmatprep.subr.mxu0 0.0
        %472 = vmatpush1.msra.mxu0 0.0
        %473 = vmatprep.subr.mxu0 0.0
        %474 = vmatpush1.msra.mxu0 0.0
        %475 = vmatprep.subr.mxu0 0.0
        %476 = vmatpush1.msra.mxu0 0.0
        %477 = vmatprep.subr.mxu0 0.0
        %478 = vmatpush1.msra.mxu0 0.0
        %479 = vmatprep.subr.mxu0 0.0
        %480 = vmatpush1.msra.mxu0 0.0
        %481 = vmatprep.subr.mxu0 0.0
        %482 = vmatpush1.msra.mxu0 0.0
        %483 = vmatprep.subr.mxu0 0.0
        %484 = vmatpush1.msra.mxu0 0.0
        %485 = vmatprep.subr.mxu0 0.0
        %486 = vmatpush1.msra.mxu0 0.0
        %487 = vmatprep.subr.mxu0 0.0
        %488 = vmatpush1.msra.mxu0 0.0
        %489 = vmatprep.subr.mxu0 0.0
        %490 = vmatpush1.msra.mxu0 0.0
        %491 = vmatprep.subr.mxu0 0.0
        %492 = vmatpush1.msra.mxu0 0.0
        %493 = vmatprep.subr.mxu0 0.0
        %494 = vmatpush1.msra.mxu0 0.0
        %495 = vmatprep.subr.mxu0 0.0
        %496 = vmatpush1.msra.mxu0 0.0
        %497 = vmatprep.subr.mxu0 0.0
        %498 = vmatpush1.msra.mxu0 0.0
        %499 = vmatprep.subr.mxu0 0.0
        %500 = vmatpush1.msra.mxu0 0.0
        %501 = vmatprep.subr.mxu0 0.0
        %502 = vmatpush1.msra.mxu0 0.0
        %503 = vmatprep.subr.mxu0 0.0
        %504 = vmatpush1.msra.mxu0 0.0
        %505 = vmatprep.subr.mxu0 0.0
        %506 = vmatpush1.msra.mxu0 0.0
        %507 = vmatprep.subr.mxu0 0.0
        %508 = vmatpush1.msra.mxu0 0.0
        %509 = vmatprep.subr.mxu0 0.0
        %510 = vmatpush1.msra.mxu0 0.0
        %511 = vmatprep.subr.mxu0 0.0
        %512 = vmatpush1.msra.mxu0 0.0
        %513 = vmatprep.subr.mxu0 0.0
        %514 = vmatpush1.msra.mxu0 0.0
        %515 = vmatprep.subr.mxu0 0.0
        %516 = vmatpush1.msra.mxu0 0.0
        %517 = vmatprep.subr.mxu0 0.0
        %518 = vmatpush1.msra.mxu0 0.0
        %519 = vmatprep.subr.mxu0 0.0
        %520 = vmatpush1.msra.mxu0 0.0
        %521 = vmatprep.subr.mxu0 0.0
        %522 = vmatpush1.msra.mxu0 0.0
        %523 = vmatprep.subr.mxu0 0.0
        %524 = vmatpush1.msra.mxu0 0.0
        %525 = vmatprep.subr.mxu0 0.0
        %526 = vmatpush1.msra.mxu0 0.0
        %527 = vmatprep.subr.mxu0 0.0
        %528 = vmatpush1.msra.mxu0 0.0
        %529 = vmatprep.mubr.f32.mxu0 0.0
        %530 = vmatmul.mubr.f32.gmra.mrb[0].mxu0 %v454
        %v531 = vpop.f32.mrb[0].mxu0
        %v532 = vadd.f32 %v435, %v531
        %v533 = vpop.f32.mrb[0].mxu0
        %534 = vmatprep.mubr.f32.mxu0 0.0
        %535 = vmatmul.mubr.f32.gmra.mrb[0].mxu0 %v457
        %v536 = vpop.f32.mrb[0].mxu0
        %v537 = vadd.f32 %v440, %v536
        %v538 = vpop.f32.mrb[0].mxu0
        %539 = vmatprep.mubr.f32.mxu0 0.0
        %540 = vmatmul.mubr.f32.gmra.mrb[0].mxu0 %v460
        %v541 = vpop.f32.mrb[0].mxu0
        %v542 = vadd.f32 %v445, %v541
        %v543 = vpop.f32.mrb[0].mxu0
        %544 = vmatprep.mubr.f32.mxu0 0.0
        %545 = vmatmul.mubr.f32.gmra.mrb[0].mxu0 %v463
        %v546 = vpop.f32.mrb[0].mxu0
        %v547 = vadd.f32 %v450, %v546
        %v548 = vpop.f32.mrb[0].mxu0
        %549 = vdwg.mxu0
        %v550 = vmax.f32 %v532, 0.0
        %v551 = vmax.f32 %v537, 0.0
        %v552 = vmax.f32 %v542, 0.0
        %v553 = vmax.f32 %v547, 0.0
        %v554 = vld [vmem:[%s5] sm:$0xff]
        %v555 = vld [vmem:[%s5 + $0x8] sm:$0xff]
        %v556 = vld [vmem:[%s5 + $0x10] sm:$0xff]
        %v557 = vld [vmem:[%s5 + $0x18] sm:$0xff]
        %v558 = vld [vmem:[%s5 + $0x20] sm:$0xff]
        %v559 = vld [vmem:[%s5 + $0x28] sm:$0x3f]
        %v560 = vld [vmem:[%s6] sm:$0xff]
        %v561 = vld [vmem:[%s6 + $0x8] sm:$0xff]
        %v562 = vld [vmem:[%s6 + $0x10] sm:$0xff]
        %v563 = vld [vmem:[%s6 + $0x18] sm:$0xff]
        %v564 = vld [vmem:[%s6 + $0x20] sm:$0xff]
        %v565 = vld [vmem:[%s6 + $0x28] sm:$0x3f]
        %567 = vset.pattern.permute.xlu0 0
        %568 = vperm.xlu0 %567, %v560
        %v569 = vpop.permute.xlu0 %568
        %572 = vset.pattern.permute.xlu0 0
        %573 = vperm.xlu0 %572, %v561
        %v574 = vpop.permute.xlu0 %573
        %577 = vset.pattern.permute.xlu0 0
        %578 = vperm.xlu0 %577, %v562
        %v579 = vpop.permute.xlu0 %578
        %582 = vset.pattern.permute.xlu0 0
        %583 = vperm.xlu0 %582, %v563
        %v584 = vpop.permute.xlu0 %583
        %587 = vset.pattern.permute.xlu0 0
        %588 = vperm.xlu0 %587, %v564
        %v589 = vpop.permute.xlu0 %588
        %592 = vset.pattern.permute.xlu0 0
        %593 = vperm.xlu0 %592, %v565
        %v594 = vpop.permute.xlu0 %593
        %vm596 = vcmask 261120
        %v598 = vsel %vm596, %v554, 0
        %v601 = vsel %vm596, %v555, 0
        %v604 = vsel %vm596, %v556, 0
        %v607 = vsel %vm596, %v557, 0
        %v610 = vsel %vm596, %v558, 0
        %v613 = vsel %vm596, %v559, 0
        %615 = vmatprep.subr.mxu0 0.0
        %616 = vmatpush1.msra.mxu0 %v550
        %617 = vmatprep.subr.mxu0 0.0
        %618 = vmatpush1.msra.mxu0 %v551
        %619 = vmatprep.subr.mxu0 0.0
        %620 = vmatpush1.msra.mxu0 %v552
        %621 = vmatprep.subr.mxu0 0.0
        %622 = vmatpush1.msra.mxu0 %v553
        %623 = vmatprep.subr.mxu0 0.0
        %624 = vmatpush1.msra.mxu0 0.0
        %625 = vmatprep.subr.mxu0 0.0
        %626 = vmatpush1.msra.mxu0 0.0
        %627 = vmatprep.subr.mxu0 0.0
        %628 = vmatpush1.msra.mxu0 0.0
        %629 = vmatprep.subr.mxu0 0.0
        %630 = vmatpush1.msra.mxu0 0.0
        %631 = vmatprep.subr.mxu0 0.0
        %632 = vmatpush1.msra.mxu0 0.0
        %633 = vmatprep.subr.mxu0 0.0
        %634 = vmatpush1.msra.mxu0 0.0
        %635 = vmatprep.subr.mxu0 0.0
        %636 = vmatpush1.msra.mxu0 0.0
        %637 = vmatprep.subr.mxu0 0.0
        %638 = vmatpush1.msra.mxu0 0.0
        %639 = vmatprep.subr.mxu0 0.0
        %640 = vmatpush1.msra.mxu0 0.0
        %641 = vmatprep.subr.mxu0 0.0
        %642 = vmatpush1.msra.mxu0 0.0
        %643 = vmatprep.subr.mxu0 0.0
        %644 = vmatpush1.msra.mxu0 0.0
        %645 = vmatprep.subr.mxu0 0.0
        %646 = vmatpush1.msra.mxu0 0.0
        %647 = vmatprep.subr.mxu0 0.0
        %648 = vmatpush1.msra.mxu0 0.0
        %649 = vmatprep.subr.mxu0 0.0
        %650 = vmatpush1.msra.mxu0 0.0
        %651 = vmatprep.subr.mxu0 0.0
        %652 = vmatpush1.msra.mxu0 0.0
        %653 = vmatprep.subr.mxu0 0.0
        %654 = vmatpush1.msra.mxu0 0.0
        %655 = vmatprep.subr.mxu0 0.0
        %656 = vmatpush1.msra.mxu0 0.0
        %657 = vmatprep.subr.mxu0 0.0
        %658 = vmatpush1.msra.mxu0 0.0
        %659 = vmatprep.subr.mxu0 0.0
        %660 = vmatpush1.msra.mxu0 0.0
        %661 = vmatprep.subr.mxu0 0.0
        %662 = vmatpush1.msra.mxu0 0.0
        %663 = vmatprep.subr.mxu0 0.0
        %664 = vmatpush1.msra.mxu0 0.0
        %665 = vmatprep.subr.mxu0 0.0
        %666 = vmatpush1.msra.mxu0 0.0
        %667 = vmatprep.subr.mxu0 0.0
        %668 = vmatpush1.msra.mxu0 0.0
        %669 = vmatprep.subr.mxu0 0.0
        %670 = vmatpush1.msra.mxu0 0.0
        %671 = vmatprep.subr.mxu0 0.0
        %672 = vmatpush1.msra.mxu0 0.0
        %673 = vmatprep.subr.mxu0 0.0
        %674 = vmatpush1.msra.mxu0 0.0
        %675 = vmatprep.subr.mxu0 0.0
        %676 = vmatpush1.msra.mxu0 0.0
        %677 = vmatprep.subr.mxu0 0.0
        %678 = vmatpush1.msra.mxu0 0.0
        %679 = vmatprep.mubr.f32.mxu0 0.0
        %680 = vmatmul.mubr.f32.gmra.mrb[0].mxu0 %v598
        %v681 = vpop.f32.mrb[0].mxu0
        %v682 = vadd.f32 %v569, %v681
        %v683 = vpop.f32.mrb[0].mxu0
        %684 = vmatprep.mubr.f32.mxu0 0.0
        %685 = vmatmul.mubr.f32.gmra.mrb[0].mxu0 %v601
        %v686 = vpop.f32.mrb[0].mxu0
        %v687 = vadd.f32 %v574, %v686
        %v688 = vpop.f32.mrb[0].mxu0
        %689 = vmatprep.mubr.f32.mxu0 0.0
        %690 = vmatmul.mubr.f32.gmra.mrb[0].mxu0 %v604
        %v691 = vpop.f32.mrb[0].mxu0
        %v692 = vadd.f32 %v579, %v691
        %v693 = vpop.f32.mrb[0].mxu0
        %694 = vmatprep.mubr.f32.mxu0 0.0
        %695 = vmatmul.mubr.f32.gmra.mrb[0].mxu0 %v607
        %v696 = vpop.f32.mrb[0].mxu0
        %v697 = vadd.f32 %v584, %v696
        %v698 = vpop.f32.mrb[0].mxu0
        %699 = vmatprep.mubr.f32.mxu0 0.0
        %700 = vmatmul.mubr.f32.gmra.mrb[0].mxu0 %v610
        %v701 = vpop.f32.mrb[0].mxu0
        %v702 = vadd.f32 %v589, %v701
        %v703 = vpop.f32.mrb[0].mxu0
        %704 = vmatprep.mubr.f32.mxu0 0.0
        %705 = vmatmul.mubr.f32.gmra.mrb[0].mxu0 %v613
        %v706 = vpop.f32.mrb[0].mxu0
        %v707 = vadd.f32 %v594, %v706
        %v708 = vpop.f32.mrb[0].mxu0
        %709 = vdwg.mxu0
        %v710 = vlaneseq
        %v711 = vshrl.u32 %v710, 7
        %v712 = vadd.s32 %v711, 8
        %v713 = vadd.s32 %v711, 16
        %v714 = vadd.s32 %v711, 24
        %v715 = vadd.s32 %v711, 32
        %v716 = vadd.s32 %v711, 40
        %vm717 = vcmp.ge.s32.totalorder %v711, 16
        %vm718 = vcmp.ge.s32.totalorder %v712, 16
        %vm719 = vcmp.ge.s32.totalorder %v713, 16
        %vm720 = vcmp.ge.s32.totalorder %v714, 16
        %vm721 = vcmp.ge.s32.totalorder %v715, 16
        %vm722 = vcmp.ge.s32.totalorder %v716, 16
        %vm723 = vcmp.lt.s32.totalorder %v711, 18
        %vm724 = vcmp.lt.s32.totalorder %v712, 18
        %vm725 = vcmp.lt.s32.totalorder %v713, 18
        %vm726 = vcmp.lt.s32.totalorder %v714, 18
        %vm727 = vcmp.lt.s32.totalorder %v715, 18
        %vm728 = vcmp.lt.s32.totalorder %v716, 18
        %vm729 = vmand %vm717, %vm723
        %vm730 = vmand %vm718, %vm724
        %vm731 = vmand %vm719, %vm725
        %vm732 = vmand %vm720, %vm726
        %vm733 = vmand %vm721, %vm727
        %vm734 = vmand %vm722, %vm728
        %vm735 = vcmp.ge.s32.totalorder %v711, 21
        %vm736 = vcmp.ge.s32.totalorder %v712, 21
        %vm737 = vcmp.ge.s32.totalorder %v713, 21
        %vm738 = vcmp.ge.s32.totalorder %v714, 21
        %vm739 = vcmp.ge.s32.totalorder %v715, 21
        %vm740 = vcmp.ge.s32.totalorder %v716, 21
        %vm741 = vcmp.lt.s32.totalorder %v711, 22
        %vm742 = vcmp.lt.s32.totalorder %v712, 22
        %vm743 = vcmp.lt.s32.totalorder %v713, 22
        %vm744 = vcmp.lt.s32.totalorder %v714, 22
        %vm745 = vcmp.lt.s32.totalorder %v715, 22
        %vm746 = vcmp.lt.s32.totalorder %v716, 22
        %vm747 = vmand %vm735, %vm741
        %vm748 = vmand %vm736, %vm742
        %vm749 = vmand %vm737, %vm743
        %vm750 = vmand %vm738, %vm744
        %vm751 = vmand %vm739, %vm745
        %vm752 = vmand %vm740, %vm746
        %vm753 = vmor %vm729, %vm747
        %vm754 = vmor %vm730, %vm748
        %vm755 = vmor %vm731, %vm749
        %vm756 = vmor %vm732, %vm750
        %vm757 = vmor %vm733, %vm751
        %vm758 = vmor %vm734, %vm752
        %vm759 = vcmp.ge.s32.totalorder %v711, 39
        %vm760 = vcmp.ge.s32.totalorder %v712, 39
        %vm761 = vcmp.ge.s32.totalorder %v713, 39
        %vm762 = vcmp.ge.s32.totalorder %v714, 39
        %vm763 = vcmp.ge.s32.totalorder %v715, 39
        %vm764 = vcmp.ge.s32.totalorder %v716, 39
        %vm765 = vcmp.lt.s32.totalorder %v711, 41
        %vm766 = vcmp.lt.s32.totalorder %v712, 41
        %vm767 = vcmp.lt.s32.totalorder %v713, 41
        %vm768 = vcmp.lt.s32.totalorder %v714, 41
        %vm769 = vcmp.lt.s32.totalorder %v715, 41
        %vm770 = vcmp.lt.s32.totalorder %v716, 41
        %vm771 = vmand %vm759, %vm765
        %vm772 = vmand %vm760, %vm766
        %vm773 = vmand %vm761, %vm767
        %vm774 = vmand %vm762, %vm768
        %vm775 = vmand %vm763, %vm769
        %vm776 = vmand %vm764, %vm770
        %vm777 = vmor %vm753, %vm771
        %vm778 = vmor %vm754, %vm772
        %vm779 = vmor %vm755, %vm773
        %vm780 = vmor %vm756, %vm774
        %vm781 = vmor %vm757, %vm775
        %vm782 = vmor %vm758, %vm776
        %vm783 = vcmp.ge.s32.totalorder %v711, 44
        %vm784 = vcmp.ge.s32.totalorder %v712, 44
        %vm785 = vcmp.ge.s32.totalorder %v713, 44
        %vm786 = vcmp.ge.s32.totalorder %v714, 44
        %vm787 = vcmp.ge.s32.totalorder %v715, 44
        %vm788 = vcmp.ge.s32.totalorder %v716, 44
        %vm789 = vcmp.lt.s32.totalorder %v711, 45
        %vm790 = vcmp.lt.s32.totalorder %v712, 45
        %vm791 = vcmp.lt.s32.totalorder %v713, 45
        %vm792 = vcmp.lt.s32.totalorder %v714, 45
        %vm793 = vcmp.lt.s32.totalorder %v715, 45
        %vm794 = vcmp.lt.s32.totalorder %v716, 45
        %vm795 = vmand %vm783, %vm789
        %vm796 = vmand %vm784, %vm790
        %vm797 = vmand %vm785, %vm791
        %vm798 = vmand %vm786, %vm792
        %vm799 = vmand %vm787, %vm793
        %vm800 = vmand %vm788, %vm794
        %vm801 = vmor %vm777, %vm795
        %vm802 = vmor %vm778, %vm796
        %vm803 = vmor %vm779, %vm797
        %vm804 = vmor %vm780, %vm798
        %vm805 = vmor %vm781, %vm799
        %vm806 = vmor %vm782, %vm800
        %vm807 = vcmp.ge.s32.totalorder %v711, 18
        %vm808 = vcmp.ge.s32.totalorder %v712, 18
        %vm809 = vcmp.ge.s32.totalorder %v713, 18
        %vm810 = vcmp.ge.s32.totalorder %v714, 18
        %vm811 = vcmp.ge.s32.totalorder %v715, 18
        %vm812 = vcmp.ge.s32.totalorder %v716, 18
        %vm813 = vcmp.lt.s32.totalorder %v711, 21
        %vm814 = vcmp.lt.s32.totalorder %v712, 21
        %vm815 = vcmp.lt.s32.totalorder %v713, 21
        %vm816 = vcmp.lt.s32.totalorder %v714, 21
        %vm817 = vcmp.lt.s32.totalorder %v715, 21
        %vm818 = vcmp.lt.s32.totalorder %v716, 21
        %vm819 = vmand %vm807, %vm813
        %vm820 = vmand %vm808, %vm814
        %vm821 = vmand %vm809, %vm815
        %vm822 = vmand %vm810, %vm816
        %vm823 = vmand %vm811, %vm817
        %vm824 = vmand %vm812, %vm818
        %vm825 = vcmp.ge.s32.totalorder %v711, 22
        %vm826 = vcmp.ge.s32.totalorder %v712, 22
        %vm827 = vcmp.ge.s32.totalorder %v713, 22
        %vm828 = vcmp.ge.s32.totalorder %v714, 22
        %vm829 = vcmp.ge.s32.totalorder %v715, 22
        %vm830 = vcmp.ge.s32.totalorder %v716, 22
        %vm831 = vcmp.lt.s32.totalorder %v711, 23
        %vm832 = vcmp.lt.s32.totalorder %v712, 23
        %vm833 = vcmp.lt.s32.totalorder %v713, 23
        %vm834 = vcmp.lt.s32.totalorder %v714, 23
        %vm835 = vcmp.lt.s32.totalorder %v715, 23
        %vm836 = vcmp.lt.s32.totalorder %v716, 23
        %vm837 = vmand %vm825, %vm831
        %vm838 = vmand %vm826, %vm832
        %vm839 = vmand %vm827, %vm833
        %vm840 = vmand %vm828, %vm834
        %vm841 = vmand %vm829, %vm835
        %vm842 = vmand %vm830, %vm836
        %vm843 = vmor %vm819, %vm837
        %vm844 = vmor %vm820, %vm838
        %vm845 = vmor %vm821, %vm839
        %vm846 = vmor %vm822, %vm840
        %vm847 = vmor %vm823, %vm841
        %vm848 = vmor %vm824, %vm842
        %vm849 = vcmp.ge.s32.totalorder %v711, 41
        %vm850 = vcmp.ge.s32.totalorder %v712, 41
        %vm851 = vcmp.ge.s32.totalorder %v713, 41
        %vm852 = vcmp.ge.s32.totalorder %v714, 41
        %vm853 = vcmp.ge.s32.totalorder %v715, 41
        %vm854 = vcmp.ge.s32.totalorder %v716, 41
        %vm855 = vcmp.lt.s32.totalorder %v711, 44
        %vm856 = vcmp.lt.s32.totalorder %v712, 44
        %vm857 = vcmp.lt.s32.totalorder %v713, 44
        %vm858 = vcmp.lt.s32.totalorder %v714, 44
        %vm859 = vcmp.lt.s32.totalorder %v715, 44
        %vm860 = vcmp.lt.s32.totalorder %v716, 44
        %vm861 = vmand %vm849, %vm855
        %vm862 = vmand %vm850, %vm856
        %vm863 = vmand %vm851, %vm857
        %vm864 = vmand %vm852, %vm858
        %vm865 = vmand %vm853, %vm859
        %vm866 = vmand %vm854, %vm860
        %vm867 = vmor %vm843, %vm861
        %vm868 = vmor %vm844, %vm862
        %vm869 = vmor %vm845, %vm863
        %vm870 = vmor %vm846, %vm864
        %vm871 = vmor %vm847, %vm865
        %vm872 = vmor %vm848, %vm866
        %vm873 = vcmp.ge.s32.totalorder %v711, 45
        %vm874 = vcmp.ge.s32.totalorder %v712, 45
        %vm875 = vcmp.ge.s32.totalorder %v713, 45
        %vm876 = vcmp.ge.s32.totalorder %v714, 45
        %vm877 = vcmp.ge.s32.totalorder %v715, 45
        %vm878 = vcmp.ge.s32.totalorder %v716, 45
        %vm879 = vcmp.lt.s32.totalorder %v711, 46
        %vm880 = vcmp.lt.s32.totalorder %v712, 46
        %vm881 = vcmp.lt.s32.totalorder %v713, 46
        %vm882 = vcmp.lt.s32.totalorder %v714, 46
        %vm883 = vcmp.lt.s32.totalorder %v715, 46
        %vm884 = vcmp.lt.s32.totalorder %v716, 46
        %vm885 = vmand %vm873, %vm879
        %vm886 = vmand %vm874, %vm880
        %vm887 = vmand %vm875, %vm881
        %vm888 = vmand %vm876, %vm882
        %vm889 = vmand %vm877, %vm883
        %vm890 = vmand %vm878, %vm884
        %vm891 = vmor %vm867, %vm885
        %vm892 = vmor %vm868, %vm886
        %vm893 = vmor %vm869, %vm887
        %vm894 = vmor %vm870, %vm888
        %vm895 = vmor %vm871, %vm889
        %vm896 = vmor %vm872, %vm890
        %v897 = vsel %vm891, 0.5, 1.0
        %v898 = vsel %vm892, 0.5, 1.0
        %v899 = vsel %vm893, 0.5, 1.0
        %v900 = vsel %vm894, 0.5, 1.0
        %v901 = vsel %vm895, 0.5, 1.0
        %v902 = vsel %vm896, 0.5, 1.0
        %v903 = vmul.f32 %v682, %v897
        %v904 = vmul.f32 %v687, %v898
        %v905 = vmul.f32 %v692, %v899
        %v906 = vmul.f32 %v697, %v900
        %v907 = vmul.f32 %v702, %v901
        %v908 = vmul.f32 %v707, %v902
        %v909 = vtanh.pop %v903
        %v910 = vtanh.pop %v904
        %v911 = vtanh.pop %v905
        %v912 = vtanh.pop %v906
        %v913 = vtanh.pop %v907
        %v914 = vtanh.pop %v908
        %v915 = vadd.f32 %v909, 1.0
        %v916 = vadd.f32 %v910, 1.0
        %v917 = vadd.f32 %v911, 1.0
        %v918 = vadd.f32 %v912, 1.0
        %v919 = vadd.f32 %v913, 1.0
        %v920 = vadd.f32 %v914, 1.0
        %v921 = vmul.f32 %v915, 0.5
        %v922 = vmul.f32 %v916, 0.5
        %v923 = vmul.f32 %v917, 0.5
        %v924 = vmul.f32 %v918, 0.5
        %v925 = vmul.f32 %v919, 0.5
        %v926 = vmul.f32 %v920, 0.5
        %v927 = vsel %vm891, 1, 0
        %v928 = vsel %vm892, 1, 0
        %v929 = vsel %vm893, 1, 0
        %v930 = vsel %vm894, 1, 0
        %v931 = vsel %vm895, 1, 0
        %v932 = vsel %vm896, 1, 0
        %vm933 = vcmp.eq.s32.totalorder %v927, 1
        %vm934 = vcmp.eq.s32.totalorder %v928, 1
        %vm935 = vcmp.eq.s32.totalorder %v929, 1
        %vm936 = vcmp.eq.s32.totalorder %v930, 1
        %vm937 = vcmp.eq.s32.totalorder %v931, 1
        %vm938 = vcmp.eq.s32.totalorder %v932, 1
        %v939 = vsel %vm933, %v921, %v682
        %v940 = vsel %vm934, %v922, %v687
        %v941 = vsel %vm935, %v923, %v692
        %v942 = vsel %vm936, %v924, %v697
        %v943 = vsel %vm937, %v925, %v702
        %v944 = vsel %vm938, %v926, %v707
        %v945 = vsel %vm801, 1, 0
        %v946 = vsel %vm802, 1, 0
        %v947 = vsel %vm803, 1, 0
        %v948 = vsel %vm804, 1, 0
        %v949 = vsel %vm805, 1, 0
        %v950 = vsel %vm806, 1, 0
        %vm951 = vcmp.eq.s32.totalorder %v945, 1
        %vm952 = vcmp.eq.s32.totalorder %v946, 1
        %vm953 = vcmp.eq.s32.totalorder %v947, 1
        %vm954 = vcmp.eq.s32.totalorder %v948, 1
        %vm955 = vcmp.eq.s32.totalorder %v949, 1
        %vm956 = vcmp.eq.s32.totalorder %v950, 1
        %v957 = vsel %vm951, %v909, %v939
        %v958 = vsel %vm952, %v910, %v940
        %v959 = vsel %vm953, %v911, %v941
        %v960 = vsel %vm954, %v912, %v942
        %v961 = vsel %vm955, %v913, %v943
        %v962 = vsel %vm956, %v914, %v944
        %963 = vst [vmem:[%s318] sm:$0xff] %v957
        %964 = vst [vmem:[%s318 + $0x8] sm:$0xff] %v958
        %965 = vst [vmem:[%s318 + $0x10] sm:$0xff] %v959
        %966 = vst [vmem:[%s318 + $0x18] sm:$0xff] %v960
        %967 = vst [vmem:[%s318 + $0x20] sm:$0xff] %v961
        %968 = vst [vmem:[%s318 + $0x28] sm:$0x3f] %v962
        %s969 = sand.u32 %s181, 1
        %s970 = scalar_lea.sflag [#allocation4], %s969
        %s971 = sand.u32 %s181, 1
        %s972 = smul.addr %s971, 48
        %s973 = scalar_lea.vmem [#allocation3], %s972
        // Predicated region
        $region87: #{tpu_custom_call.1} parent=81 // pred_check
          %p974 = pneg %p191
        $region88: #{tpu_custom_call.1} parent=81 // pred_check_branch
          %976 = sbr.rel (%p974) target = $region90
        $region89: #{tpu_custom_call.1} parent=81 // pred_region
          %s978 = ssub.s32 768, 768
          %979 = vsyncadd %s970, %s978
          %s980 = smul.addr %s21, 128
          %s981 = scalar_lea.hbm %s7, %s980
          %s982 = sshll.u32 %s973, 4
          %s983 = int_to_ptr.vmem [resolvable:$true] %s982
          %988 = dma.vmem_to_hbm [thread:$0]  %s983, 768, %s981, %s970, 128, 384, 8
        $region90: #{tpu_custom_call.1} parent=81 // pred_fallthru
          _
      $region82: #{tpu_custom_call.1} parent=5 // pred_fallthru
        _
      %p989 = scmp.le.s32.totalorder 2, %s16
      // Predicated region
      $region91: #{tpu_custom_call.1} parent=5 // pred_check
        %p990 = pneg %p989
      $region92: #{tpu_custom_call.1} parent=5 // pred_check_branch
        %992 = sbr.rel (%p990) target = $region94
      $region93: #{tpu_custom_call.1} parent=5 // pred_region
        %s993 = ssub.s32 %s16, 2
        // Predicated region
        $region95: #{tpu_custom_call.1} parent=93 // pred_check
          %p994 = pneg %p197
        $region96: #{tpu_custom_call.1} parent=93 // pred_check_branch
          %996 = sbr.rel (%p994) target = $region98
        $region97: #{tpu_custom_call.1} parent=93 // pred_region
          %s997 = sand.u32 %s182, 1
          %s998 = scalar_lea.sflag [#allocation4], %s997
          %s999 = sand.u32 %s182, 1
          %s1000 = smul.addr %s999, 48
          %s1001 = scalar_lea.vmem [#allocation3], %s1000
          %1002 = dma.done %s998, 768
        $region98: #{tpu_custom_call.1} parent=93 // pred_fallthru
          _
      $region94: #{tpu_custom_call.1} parent=5 // pred_fallthru
        _
    $region6: #{tpu_custom_call.1} parent=1 // loop_footer
      %s20 = sadd.s32 1, %s16
    $region7: #{tpu_custom_call.1} parent=1 // loop_footer_branch
      %15 = sbr.rel target = $region3
    $region8: #{tpu_custom_call.1} parent=1 // loop_exit
      _
    %1003 = vsyncpa [#allocation4], 1
    %s1004 = scalar_lea.sflag [#allocation4], 1
    %1005 = vsyncpa %s1004, 1

</llo_original>
